<compile_context>
chip_gen: v5e
topology: v5e:2x2
jax: 0.10.0
libtpu: 0.0.40
codegen_flags: <defaults>
</compile_context>

<pallas_src>
import jax
import jax.numpy as jnp
from jax.experimental import pallas as pl
from jax.experimental.pallas import tpu as pltpu


def graph_attention_kernel(xk_ref, xq_ref, gam_ref, o_ref):
    f32 = jnp.float32
    x = xk_ref[0]        # (C, N)   keys / values: full feature matrix, this batch
    xq = xq_ref[0]       # (C, TQ)  query slice (lane-dense tile)
    gamma_p = gam_ref[0]
    gamma_c = gam_ref[1]

    # ---- position attention (this query tile) ----
    # E[q, m] = sum_c xq[c, q] * x[c, m]
    e = jax.lax.dot_general(xq, x, (((0,), (0,)), ((), ())),
                            preferred_element_type=f32)               # (TQ, N)
    # softmax(rowmax(E) - E) == softmax(rowmin(E) - E): one reduction pass,
    # exp argument <= 0 (numerically stable, matches F.softmax semantics).
    z = jnp.min(e, axis=-1, keepdims=True) - e
    p = jnp.exp(z)
    a = p * pl.reciprocal(jnp.sum(p, axis=-1, keepdims=True), approx=True)
    # PA[:, q-tile] = X @ A^T
    pa = jax.lax.dot_general(x, a, (((1,), (1,)), ((), ())),
                             preferred_element_type=f32)               # (C, TQ)

    # ---- channel attention ----
    ec = jax.lax.dot_general(x, x, (((1,), (1,)), ((), ())),
                             preferred_element_type=f32)               # (C, C)
    zc = jnp.min(ec, axis=-1, keepdims=True) - ec
    pc = jnp.exp(zc)
    ac = pc * pl.reciprocal(jnp.sum(pc, axis=-1, keepdims=True), approx=True)
    # CA[:, q-tile] = Ac @ X[:, q-tile]
    ca = jnp.dot(ac, xq, preferred_element_type=f32)                   # (C, TQ)

    # GraphAttention: (gamma_p*PA + X) + (gamma_c*CA + X)
    o_ref[0] = (gamma_p * pa + gamma_c * ca + 2.0 * xq).astype(o_ref.dtype)


def graph_attention_forward(points, gamma_p, gamma_c, tq=128):
    """points: PyTorch layout [B, C, nsample, npoint]; returns same layout."""
    B, C, ns, npt = points.shape
    N = ns * npt
    if N % tq != 0:
        tq = N                       # fall back to a single query tile
    n_q = N // tq

    x = points.reshape(B, C, N)      # free reshape (no HBM transpose)
    gammas = jnp.array([gamma_p, gamma_c], jnp.float32)

    out = pl.pallas_call(
        graph_attention_kernel,
        out_shape=jax.ShapeDtypeStruct((B, C, N), jnp.float32),
        grid=(B, n_q),
        in_specs=[
            # full (C, N) feature matrix of batch b; revisited across q steps
            pl.BlockSpec((1, C, N), lambda b, q: (b, 0, 0)),
            # lane-dense (C, TQ) query tile
            pl.BlockSpec((1, C, tq), lambda b, q: (b, 0, q)),
            # gammas: two f32 scalars in SMEM
            pl.BlockSpec(memory_space=pltpu.MemorySpace.SMEM),
        ],
        out_specs=pl.BlockSpec((1, C, tq), lambda b, q: (b, 0, q)),
        compiler_params=pltpu.CompilerParams(
            dimension_semantics=("parallel", "parallel")),
    )(x, x, gammas)
    return out.reshape(B, C, ns, npt)


def graph_attention_reference(points, gamma_p, gamma_c):
    """Pure-JAX mirror of the PyTorch forward for validation."""
    HI = jax.lax.Precision.HIGHEST
    B, C, ns, npt = points.shape
    x = points.reshape(B, C, ns * npt)
    # position attention
    e = jnp.einsum("bcn,bcm->bnm", x, x, precision=HI)                 # (B, N, N)
    a = jax.nn.softmax(jnp.max(e, -1, keepdims=True) - e, axis=-1)
    pa = jnp.einsum("bcm,bnm->bcn", x, a, precision=HI)                # X @ A^T
    # channel attention
    ec = jnp.einsum("bcn,bdn->bcd", x, x, precision=HI)                # (B, C, C)
    ac = jax.nn.softmax(jnp.max(ec, -1, keepdims=True) - ec, axis=-1)
    ca = jnp.einsum("bcd,bdn->bcn", ac, x, precision=HI)
    out = gamma_p * pa + gamma_c * ca + 2.0 * x
    return out.reshape(B, C, ns, npt)


if __name__ == "__main__":
    B, C, ns, npoint = 2, 4, 16, 16          # points: [B, C, nsample, npoint]

    key = jax.random.PRNGKey(0)
    kx, _ = jax.random.split(key)
    points = jax.random.normal(kx, (B, C, ns, npoint), jnp.float32)
    # nn.Parameter(torch.zeros(1)) initializes gamma to 0 (output would be
    # trivially 2*points); use non-trivial values to exercise both attention paths.
    gamma_p, gamma_c = 0.7, -0.3

    out = graph_attention_forward(points, gamma_p, gamma_c)
    out = jax.block_until_ready(out)

    ref = graph_attention_reference(points, gamma_p, gamma_c)
    assert out.shape == points.shape, out.shape
    assert bool(jnp.all(jnp.isfinite(out)))
    max_err = float(jnp.max(jnp.abs(out - ref)))
    assert max_err < 2e-2, f"max abs err {max_err}"
    print("KERNEL_OK")
</pallas_src>

<mosaic_0001>
module attributes {stable_mosaic.version = 11 : i64} {
  func.func @graph_attention_kernel(%arg0: i32, %arg1: i32, %arg2: memref<1x4x256xf32, #tpu.memory_space<vmem>>, %arg3: memref<1x4x128xf32, #tpu.memory_space<vmem>>, %arg4: memref<2xf32, #tpu.memory_space<smem>>, %arg5: memref<1x4x128xf32, #tpu.memory_space<vmem>>) attributes {dimension_semantics = [#tpu.dimension_semantics<parallel>, #tpu.dimension_semantics<parallel>], iteration_bounds = array<i64: 2, 2>, scalar_prefetch = 0 : i64, scratch_operands = 0 : i64, tpu.core_type = #tpu.core_type<tc>, window_params = [{transform_indices = @transform_0, window_bounds = array<i64: 1, 4, 256>}, {transform_indices = @transform_1, window_bounds = array<i64: 1, 4, 128>}, {transform_indices = @transform_2, window_bounds = array<i64: 2>}, {transform_indices = @transform_3, window_bounds = array<i64: 1, 4, 128>}]} {
    %c0 = arith.constant 0 : index
    %c0_0 = arith.constant 0 : index
    %c0_1 = arith.constant 0 : index
    %0 = vector.load %arg2[%c0, %c0_0, %c0_1] : memref<1x4x256xf32, #tpu.memory_space<vmem>>, vector<1x4x256xf32>
    %1 = vector.shape_cast %0 : vector<1x4x256xf32> to vector<4x256xf32>
    %c0_2 = arith.constant 0 : index
    %c0_3 = arith.constant 0 : index
    %c0_4 = arith.constant 0 : index
    %2 = vector.load %arg3[%c0_2, %c0_3, %c0_4] : memref<1x4x128xf32, #tpu.memory_space<vmem>>, vector<1x4x128xf32>
    %3 = vector.shape_cast %2 : vector<1x4x128xf32> to vector<4x128xf32>
    %c0_5 = arith.constant 0 : index
    %4 = memref.load %arg4[%c0_5] : memref<2xf32, #tpu.memory_space<smem>>
    %c1 = arith.constant 1 : index
    %5 = memref.load %arg4[%c1] : memref<2xf32, #tpu.memory_space<smem>>
    %cst = arith.constant dense<0.000000e+00> : vector<128x256xf32>
    %6 = tpu.matmul %3, %1, %cst {dimension_numbers = #tpu.dot_dimension_numbers<[0], [0], [1], [1], [0, 1, 1, 1], [], []>} : vector<4x128xf32>, vector<4x256xf32>, vector<128x256xf32> -> vector<128x256xf32>
    %cst_6 = arith.constant dense<0x7F800000> : vector<128xf32>
    %7 = vector.multi_reduction <minimumf>, %6, %cst_6 [1] : vector<128x256xf32> to vector<128xf32>
    %8 = vector.shape_cast %7 : vector<128xf32> to vector<128x1xf32>
    %9 = vector.broadcast %8 : vector<128x1xf32> to vector<128x256xf32>
    %10 = arith.subf %9, %6 : vector<128x256xf32>
    %11 = math.exp %10 : vector<128x256xf32>
    %cst_7 = arith.constant dense<0.000000e+00> : vector<128xf32>
    %12 = vector.multi_reduction <add>, %11, %cst_7 [1] : vector<128x256xf32> to vector<128xf32>
    %13 = vector.shape_cast %12 : vector<128xf32> to vector<128x1xf32>
    %14 = tpu.reciprocal %13 {approx = true} : vector<128x1xf32> -> vector<128x1xf32>
    %15 = vector.broadcast %14 : vector<128x1xf32> to vector<128x256xf32>
    %16 = arith.mulf %11, %15 : vector<128x256xf32>
    %cst_8 = arith.constant dense<0.000000e+00> : vector<4x128xf32>
    %17 = tpu.matmul %1, %16, %cst_8 {dimension_numbers = #tpu.dot_dimension_numbers<[1], [1], [0], [0], [0, 0, 1, 0], [], []>} : vector<4x256xf32>, vector<128x256xf32>, vector<4x128xf32> -> vector<4x128xf32>
    %cst_9 = arith.constant dense<0.000000e+00> : vector<4x4xf32>
    %18 = tpu.matmul %1, %1, %cst_9 {dimension_numbers = #tpu.dot_dimension_numbers<[1], [1], [0], [0], [0, 0, 1, 0], [], []>} : vector<4x256xf32>, vector<4x256xf32>, vector<4x4xf32> -> vector<4x4xf32>
    %cst_10 = arith.constant dense<0x7F800000> : vector<4xf32>
    %19 = vector.multi_reduction <minimumf>, %18, %cst_10 [1] : vector<4x4xf32> to vector<4xf32>
    %20 = vector.shape_cast %19 : vector<4xf32> to vector<4x1xf32>
    %21 = vector.broadcast %20 : vector<4x1xf32> to vector<4x4xf32>
    %22 = arith.subf %21, %18 : vector<4x4xf32>
    %23 = math.exp %22 : vector<4x4xf32>
    %cst_11 = arith.constant dense<0.000000e+00> : vector<4xf32>
    %24 = vector.multi_reduction <add>, %23, %cst_11 [1] : vector<4x4xf32> to vector<4xf32>
    %25 = vector.shape_cast %24 : vector<4xf32> to vector<4x1xf32>
    %26 = tpu.reciprocal %25 {approx = true} : vector<4x1xf32> -> vector<4x1xf32>
    %27 = vector.broadcast %26 : vector<4x1xf32> to vector<4x4xf32>
    %28 = arith.mulf %23, %27 : vector<4x4xf32>
    %cst_12 = arith.constant dense<0.000000e+00> : vector<4x128xf32>
    %29 = tpu.matmul %28, %3, %cst_12 {dimension_numbers = #tpu.dot_dimension_numbers<[1], [0], [0], [1], [0, 0, 1, 1], [], []>} : vector<4x4xf32>, vector<4x128xf32>, vector<4x128xf32> -> vector<4x128xf32>
    %30 = vector.broadcast %4 : f32 to vector<4x128xf32>
    %31 = arith.mulf %30, %17 : vector<4x128xf32>
    %32 = vector.broadcast %5 : f32 to vector<4x128xf32>
    %33 = arith.mulf %32, %29 : vector<4x128xf32>
    %34 = arith.addf %31, %33 : vector<4x128xf32>
    %cst_13 = arith.constant 2.000000e+00 : f32
    %35 = vector.broadcast %cst_13 : f32 to vector<4x128xf32>
    %36 = arith.mulf %35, %3 : vector<4x128xf32>
    %37 = arith.addf %34, %36 : vector<4x128xf32>
    %c0_14 = arith.constant 0 : index
    %c0_15 = arith.constant 0 : index
    %c0_16 = arith.constant 0 : index
    %38 = vector.load %arg5[%c0_14, %c0_15, %c0_16] : memref<1x4x128xf32, #tpu.memory_space<vmem>>, vector<1x4x128xf32>
    %39 = vector.shape_cast %38 : vector<1x4x128xf32> to vector<4x128xf32>
    %40 = vector.shape_cast %37 : vector<4x128xf32> to vector<1x4x128xf32>
    tpu.vector_store %arg5[%c0_14, %c0_15, %c0_16], %40 {strides = array<i32>} : memref<1x4x128xf32, #tpu.memory_space<vmem>>, vector<1x4x128xf32>,
    return
  }
  func.func @transform_0(%arg0: i32, %arg1: i32) -> (i32, i32, i32) {
    %c0_i32 = arith.constant 0 : i32
    %c0_i32_0 = arith.constant 0 : i32
    %c0_i32_1 = arith.constant 0 : i32
    return %arg0, %c0_i32, %c0_i32_0 : i32, i32, i32
  }
  func.func @transform_1(%arg0: i32, %arg1: i32) -> (i32, i32, i32) {
    %c0_i32 = arith.constant 0 : i32
    %c0_i32_0 = arith.constant 0 : i32
    return %arg0, %c0_i32, %arg1 : i32, i32, i32
  }
  func.func @transform_2(%arg0: i32, %arg1: i32) -> i32 {
    %c0_i32 = arith.constant 0 : i32
    %c0_i32_0 = arith.constant 0 : i32
    return %c0_i32 : i32
  }
  func.func @transform_3(%arg0: i32, %arg1: i32) -> (i32, i32, i32) {
    %c0_i32 = arith.constant 0 : i32
    %c0_i32_0 = arith.constant 0 : i32
    return %arg0, %c0_i32, %arg1 : i32, i32, i32
  }
}

</mosaic_0001>

<llo_original>
// kernel: tpu_custom_call.1
$region0: #{tpu_custom_call.1}
  #allocation0 [shape = 'u32[]', space=smem, size = 0x4, offset = 0x4, fixed_abs, tag = 'smem constant byte address 0x4 - core index']
  #allocation1 [shape = 'u32[72,128]{1,0:T(1,128)}', space=vmem, size = 0x9000, scoped, tag = 'internal scratch']
  %s0 = inlined_call_operand.hbm [shape: f32[2,4,256], index: 0, kind: input, shape index: {}]
  %s1 = inlined_call_operand.hbm [shape: f32[2,4,256], index: 1, kind: input, shape index: {}]
  %s2 = inlined_call_operand.vmem [shape: f32[2], index: 2, kind: input, shape index: {}]
  %s3 = inlined_call_operand.hbm [shape: f32[2,4,256], index: 3, kind: output, shape index: {}]
  %s4 = sld [smem:[#allocation0]]
  $region57: #{tpu_custom_call.1} parent=0
    _
  %s6 = ssub.s32 1, %s4
  %s7 = scalar_select 0, %s6, %s4
  $region1: #{tpu_custom_call.1} parent=0
    #allocation2 [shape = 'u8[8192]{0}', space=vmem, size = 0x2000, scoped, tag = 'input window, operand 0']
    #allocation3 [shape = 's32[2]{0}', space=sflag, size = 0x8, scoped, tag = 'scoped memory for tpu_custom_call.1']
    #allocation4 [shape = 's32[2]{0}', space=sflag, size = 0x8, scoped, tag = 'scoped memory for tpu_custom_call.1']
    #allocation5 [shape = 's32[2]{0}', space=sflag, size = 0x8, scoped, tag = 'scoped memory for tpu_custom_call.1']
    #allocation6 [shape = 'u8[4096]{0}', space=vmem, size = 0x1000, scoped, tag = 'input window, operand 1']
    #allocation7 [shape = 's32[2]{0}', space=sflag, size = 0x8, scoped, tag = 'scoped memory for tpu_custom_call.1']
    #allocation8 [shape = 'u8[512]{0}', space=smem, size = 0x200, scoped, tag = 'input window, operand 2, single buffered']
    #allocation9 [shape = 'u8[4096]{0}', space=vmem, size = 0x1000, scoped, tag = 'output window, operand 0']
    %8 = vsyncpa [#allocation3], 0
    %s9 = scalar_lea.sflag [#allocation3], 1
    %10 = vsyncpa %s9, 0
    %11 = vsyncpa [#allocation7], 0
    %s12 = scalar_lea.sflag [#allocation7], 1
    %13 = vsyncpa %s12, 0
    %14 = vsyncpa [#allocation5], 0
    %15 = vsyncpa [#allocation4], 0
    %s16 = scalar_lea.sflag [#allocation4], 1
    %17 = vsyncpa %s16, 0
    loop: start=0, step=1, limit=6
    $region2: #{tpu_custom_call.1} parent=1 // loop_pre_header
      _
    $region3: #{tpu_custom_call.1} parent=1 // loop_header
      %s19 = sphi 0, %s23
      %p20 = scmp.ge.s32.totalorder %s19, 6
      %s26 = sphi 0, %s38
      %s27 = sphi 0, %s34
      %s28 = sphi 0, %s26
      %s29 = sphi 0, %s27
      %s30 = sphi 0, %s28
      %s31 = sphi 0, %s29
      %s41 = sphi 0, %s43
      %s44 = sphi 0, %s41
      %s45 = sphi 0, %s44
      %s61 = sphi 0, %s45
      %s69 = sphi 0, %s71
      %s72 = sphi 0, %s69
      %s73 = sphi 0, %s72
      %s89 = sphi 0, %s73
      %s93 = sphi 0, %s93
      %s95 = sphi 0, %s93
      %s96 = sphi 0, %s95
      %s110 = sphi 0, %s96
      %s118 = sphi 0, %s120
      %s121 = sphi 0, %s118
      %s122 = sphi 0, %s121
      %s138 = sphi 0, %s122
    $region4: #{tpu_custom_call.1} parent=1 // loop_header_branch
      %22 = sbr.rel (%p20) target = $region8
    $region5: #{tpu_custom_call.1} parent=1 // loop_body
      %s24 = ssub.s32 %s19, 1
      %s25 = ssub.s32 %s19, 2
      %s32 = sadd.s32 1, %s27
      %p33 = scmp.ge.s32.totalorder %s32, 2
      %s34 = scalar_select %p33, 0, %s32
      %s35 = sadd.s32 1, %s26
      %s36 = scalar_select %p33, %s35, %s26
      %p37 = scmp.ge.s32.totalorder %s36, 2
      %s38 = scalar_select %p37, 0, %s36
      %s39 = ssub.s32 %s26, %s38
      %p40 = scmp.eq.s32.totalorder %s39, 0
      %s42 = sadd.s32 %s41, 1
      %s43 = scalar_select %p40, %s41, %s42
      %p46 = pneg %p40
      %p47 = scmp.eq.s32.totalorder %s19, 3
      %p48 = por %p46, %p47
      %p49 = scmp.ne.s32.totalorder %s41, %s44
      %p50 = scmp.eq.s32.totalorder %s19, 0
      %p51 = por %p49, %p50
      %p52 = scmp.ne.s32.totalorder %s41, %s44
      %p53 = scmp.eq.s32.totalorder %s24, 3
      %p54 = por %p52, %p53
      %p55 = scmp.ne.s32.totalorder %s44, %s45
      %p56 = scmp.eq.s32.totalorder %s24, 0
      %p57 = por %p55, %p56
      %p58 = scmp.ne.s32.totalorder %s44, %s45
      %p59 = scmp.eq.s32.totalorder %s25, 3
      %p60 = por %p58, %p59
      %p62 = scmp.ne.s32.totalorder %s45, %s61
      %p63 = scmp.eq.s32.totalorder %s25, 0
      %p64 = por %p62, %p63
      %s65 = ssub.s32 %s26, %s38
      %s66 = ssub.s32 %s27, %s34
      %s67 = sor.u32 %s65, %s66
      %p68 = scmp.eq.s32.totalorder %s67, 0
      %s70 = sadd.s32 %s69, 1
      %s71 = scalar_select %p68, %s69, %s70
      %p74 = pneg %p68
      %p75 = scmp.eq.s32.totalorder %s19, 3
      %p76 = por %p74, %p75
      %p77 = scmp.ne.s32.totalorder %s69, %s72
      %p78 = scmp.eq.s32.totalorder %s19, 0
      %p79 = por %p77, %p78
      %p80 = scmp.ne.s32.totalorder %s69, %s72
      %p81 = scmp.eq.s32.totalorder %s24, 3
      %p82 = por %p80, %p81
      %p83 = scmp.ne.s32.totalorder %s72, %s73
      %p84 = scmp.eq.s32.totalorder %s24, 0
      %p85 = por %p83, %p84
      %p86 = scmp.ne.s32.totalorder %s72, %s73
      %p87 = scmp.eq.s32.totalorder %s25, 3
      %p88 = por %p86, %p87
      %p90 = scmp.ne.s32.totalorder %s73, %s89
      %p91 = scmp.eq.s32.totalorder %s25, 0
      %p92 = por %p90, %p91
      %s94 = sadd.s32 %s93, 1
      %p97 = scmp.eq.s32.totalorder %s19, 3
      %p98 = scmp.ne.s32.totalorder %s93, %s95
      %p99 = scmp.eq.s32.totalorder %s19, 0
      %p100 = por %p98, %p99
      %p101 = scmp.ne.s32.totalorder %s93, %s95
      %p102 = scmp.eq.s32.totalorder %s24, 3
      %p103 = por %p101, %p102
      %p104 = scmp.ne.s32.totalorder %s95, %s96
      %p105 = scmp.eq.s32.totalorder %s24, 0
      %p106 = por %p104, %p105
      %p107 = scmp.ne.s32.totalorder %s95, %s96
      %p108 = scmp.eq.s32.totalorder %s25, 3
      %p109 = por %p107, %p108
      %p111 = scmp.ne.s32.totalorder %s96, %s110
      %p112 = scmp.eq.s32.totalorder %s25, 0
      %p113 = por %p111, %p112
      %s114 = ssub.s32 %s26, %s38
      %s115 = ssub.s32 %s27, %s34
      %s116 = sor.u32 %s114, %s115
      %p117 = scmp.eq.s32.totalorder %s116, 0
      %s119 = sadd.s32 %s118, 1
      %s120 = scalar_select %p117, %s118, %s119
      %p123 = pneg %p117
      %p124 = scmp.eq.s32.totalorder %s19, 3
      %p125 = por %p123, %p124
      %p126 = scmp.ne.s32.totalorder %s118, %s121
      %p127 = scmp.eq.s32.totalorder %s19, 0
      %p128 = por %p126, %p127
      %p129 = scmp.ne.s32.totalorder %s118, %s121
      %p130 = scmp.eq.s32.totalorder %s24, 3
      %p131 = por %p129, %p130
      %p132 = scmp.ne.s32.totalorder %s121, %s122
      %p133 = scmp.eq.s32.totalorder %s24, 0
      %p134 = por %p132, %p133
      %p135 = scmp.ne.s32.totalorder %s121, %s122
      %p136 = scmp.eq.s32.totalorder %s25, 3
      %p137 = por %p135, %p136
      %p139 = scmp.ne.s32.totalorder %s122, %s138
      %p140 = scmp.eq.s32.totalorder %s25, 0
      %p141 = por %p139, %p140
      %p142 = scmp.le.s32.totalorder 1, %s19
      %p143 = scmp.lt.s32.totalorder %s19, 5
      %p144 = pnand %p142, %p143
      %p145 = pneg %p144
      // Predicated region
      $region9: #{tpu_custom_call.1} parent=5 // pred_check
        _
      $region10: #{tpu_custom_call.1} parent=5 // pred_check_branch
        %147 = sbr.rel (%p144) target = $region12
      $region11: #{tpu_custom_call.1} parent=5 // pred_region
        %s148 = ssub.s32 %s19, 1
        // Predicated region
        $region13: #{tpu_custom_call.1} parent=11 // pred_check
          %p149 = pneg %p106
        $region14: #{tpu_custom_call.1} parent=11 // pred_check_branch
          %151 = sbr.rel (%p149) target = $region16
        $region15: #{tpu_custom_call.1} parent=11 // pred_region
          %153 = vsyncadd [#allocation5], 0
          %s155 = sshll.u32 %s2, 4
          %s156 = int_to_ptr.vmem [resolvable:$true] %s155
          %158 = dma.vmem_to_smem %s156, 16, [#allocation8], [#allocation5]
        $region16: #{tpu_custom_call.1} parent=11 // pred_fallthru
          _
      $region12: #{tpu_custom_call.1} parent=5 // pred_fallthru
        _
      %p159 = scmp.lt.s32.totalorder %s19, 4
      // Predicated region
      $region17: #{tpu_custom_call.1} parent=5 // pred_check
        %p160 = pneg %p159
      $region18: #{tpu_custom_call.1} parent=5 // pred_check_branch
        %162 = sbr.rel (%p160) target = $region20
      $region19: #{tpu_custom_call.1} parent=5 // pred_region
        // Predicated region
        $region21: #{tpu_custom_call.1} parent=19 // pred_check
          %p163 = pneg %p51
        $region22: #{tpu_custom_call.1} parent=19 // pred_check_branch
          %165 = sbr.rel (%p163) target = $region24
        $region23: #{tpu_custom_call.1} parent=19 // pred_region
          %s166 = sand.u32 %s41, 1
          %s167 = scalar_lea.sflag [#allocation3], %s166
          %s168 = sand.u32 %s41, 1
          %s169 = smul.addr %s168, 8
          %s170 = scalar_lea.vmem [#allocation2], %s169
          %172 = vsyncadd %s167, 0
          %s173 = smul.addr %s26, 2
          %s174 = smul.addr %s173, 4
          %s175 = scalar_lea.hbm %s0, %s174
          %s177 = sshll.u32 %s175, 4
          %s178 = int_to_ptr.hbm [resolvable:$true] %s177
          %s179 = sshll.u32 %s170, 4
          %s180 = int_to_ptr.vmem [resolvable:$true] %s179
          %182 = dma.hbm_to_vmem [thread:$0]  %s178, 128, %s180, %s167
        $region24: #{tpu_custom_call.1} parent=19 // pred_fallthru
          _
        // Predicated region
        $region25: #{tpu_custom_call.1} parent=19 // pred_check
          %p183 = pneg %p79
        $region26: #{tpu_custom_call.1} parent=19 // pred_check_branch
          %185 = sbr.rel (%p183) target = $region28
        $region27: #{tpu_custom_call.1} parent=19 // pred_region
          %s186 = sand.u32 %s69, 1
          %s187 = scalar_lea.sflag [#allocation7], %s186
          %s188 = sand.u32 %s69, 1
          %s189 = smul.addr %s188, 4
          %s190 = scalar_lea.vmem [#allocation6], %s189
          %192 = vsyncadd %s187, 0
          %s193 = smul.addr %s26, 2
          %s194 = sadd.s32 %s27, %s193
          %s195 = smul.addr %s194, 4
          %s196 = scalar_lea.hbm %s1, %s195
          %s198 = sshll.u32 %s196, 4
          %s199 = int_to_ptr.hbm [resolvable:$true] %s198
          %s200 = sshll.u32 %s190, 4
          %s201 = int_to_ptr.vmem [resolvable:$true] %s200
          %203 = dma.hbm_to_vmem [thread:$0]  %s199, 64, %s201, %s187
        $region28: #{tpu_custom_call.1} parent=19 // pred_fallthru
          _
      $region20: #{tpu_custom_call.1} parent=5 // pred_fallthru
        _
      %p204 = scmp.le.s32.totalorder 1, %s19
      %p205 = scmp.lt.s32.totalorder %s19, 5
      %p206 = pnand %p204, %p205
      %p207 = pneg %p206
      // Predicated region
      $region29: #{tpu_custom_call.1} parent=5 // pred_check
        _
      $region30: #{tpu_custom_call.1} parent=5 // pred_check_branch
        %209 = sbr.rel (%p206) target = $region32
      $region31: #{tpu_custom_call.1} parent=5 // pred_region
        %s210 = ssub.s32 %s19, 1
        %s211 = sand.u32 %s44, 1
        %s212 = scalar_lea.sflag [#allocation3], %s211
        %s213 = sand.u32 %s44, 1
        %s214 = smul.addr %s213, 8
        %s215 = scalar_lea.vmem [#allocation2], %s214
        // Predicated region
        $region33: #{tpu_custom_call.1} parent=31 // pred_check
          %p216 = pneg %p57
        $region34: #{tpu_custom_call.1} parent=31 // pred_check_branch
          %218 = sbr.rel (%p216) target = $region36
        $region35: #{tpu_custom_call.1} parent=31 // pred_region
          %220 = dma.done %s212, 128
        $region36: #{tpu_custom_call.1} parent=31 // pred_fallthru
          _
        %s221 = sand.u32 %s72, 1
        %s222 = scalar_lea.sflag [#allocation7], %s221
        %s223 = sand.u32 %s72, 1
        %s224 = smul.addr %s223, 4
        %s225 = scalar_lea.vmem [#allocation6], %s224
        // Predicated region
        $region37: #{tpu_custom_call.1} parent=31 // pred_check
          %p226 = pneg %p85
        $region38: #{tpu_custom_call.1} parent=31 // pred_check_branch
          %228 = sbr.rel (%p226) target = $region40
        $region39: #{tpu_custom_call.1} parent=31 // pred_region
          %230 = dma.done %s222, 64
        $region40: #{tpu_custom_call.1} parent=31 // pred_fallthru
          _
        // Predicated region
        $region41: #{tpu_custom_call.1} parent=31 // pred_check
          %p231 = pneg %p106
        $region42: #{tpu_custom_call.1} parent=31 // pred_check_branch
          %233 = sbr.rel (%p231) target = $region44
        $region43: #{tpu_custom_call.1} parent=31 // pred_region
          %235 = dma.done [#allocation5], 16
        $region44: #{tpu_custom_call.1} parent=31 // pred_fallthru
          _
        %236 = sfence
        %s237 = sand.u32 %s44, 1
        %s238 = scalar_lea.sflag [#allocation3], %s237
        %s239 = sand.u32 %s44, 1
        %s240 = smul.addr %s239, 8
        %s241 = scalar_lea.vmem [#allocation2], %s240
        %p242 = pneg %p57
        %p243 = pneg %p54
        %s244 = sand.u32 %s72, 1
        %s245 = scalar_lea.sflag [#allocation7], %s244
        %s246 = sand.u32 %s72, 1
        %s247 = smul.addr %s246, 4
        %s248 = scalar_lea.vmem [#allocation6], %s247
        %p249 = pneg %p85
        %p250 = pneg %p82
        %p251 = pneg %p106
        %p252 = pneg %p103
        %p253 = pneg %p134
        %p254 = pneg %p131
        %s255 = sand.u32 %s121, 1
        %s256 = scalar_lea.sflag [#allocation4], %s255
        %s257 = sand.u32 %s121, 1
        %s258 = smul.addr %s257, 4
        %s259 = scalar_lea.vmem [#allocation9], %s258
        %v260 = vld [vmem:[%s215] sm:$0xff]
        %v261 = vld [vmem:[%s225] sm:$0xf]
        %s262 = sld [smem:[#allocation8]]
        %s263 = sld [smem:[#allocation8 + $0x1]]
        %264 = vxpose.xlu0.b32.start [1/16] %v261, 128
        %265 = vxpose.xlu0.b32.cont [2/16] 0.0, 128
        %266 = vxpose.xlu0.b32.cont [3/16] 0.0, 128
        %267 = vxpose.xlu0.b32.cont [4/16] 0.0, 128
        %268 = vxpose.xlu0.b32.cont [5/16] 0.0, 128
        %269 = vxpose.xlu0.b32.cont [6/16] 0.0, 128
        %270 = vxpose.xlu0.b32.cont [7/16] 0.0, 128
        %271 = vxpose.xlu0.b32.cont [8/16] 0.0, 128
        %272 = vxpose.xlu0.b32.cont [9/16] 0.0, 128
        %273 = vxpose.xlu0.b32.cont [10/16] 0.0, 128
        %274 = vxpose.xlu0.b32.cont [11/16] 0.0, 128
        %275 = vxpose.xlu0.b32.cont [12/16] 0.0, 128
        %276 = vxpose.xlu0.b32.cont [13/16] 0.0, 128
        %277 = vxpose.xlu0.b32.cont [14/16] 0.0, 128
        %278 = vxpose.xlu0.b32.cont [15/16] 0.0, 128
        %279 = vxpose.xlu0.b32.end [16/16] 0.0, 128
        %v280 = vpop.trf.xlu0
        %v281 = vpop.trf.xlu0
        %v282 = vpop.trf.xlu0
        %v283 = vpop.trf.xlu0
        %v284 = vpop.trf.xlu0
        %v285 = vpop.trf.xlu0
        %v286 = vpop.trf.xlu0
        %v287 = vpop.trf.xlu0
        %v288 = vpop.trf.xlu0
        %v289 = vpop.trf.xlu0
        %v290 = vpop.trf.xlu0
        %v291 = vpop.trf.xlu0
        %v292 = vpop.trf.xlu0
        %v293 = vpop.trf.xlu0
        %v294 = vpop.trf.xlu0
        %v295 = vpop.trf.xlu0
        %297 = vst [vmem:[#allocation1] ss:$2 sm:$0xff] %v260
        %v298 = vld.sshfl [vmem:[#allocation1] sm:$0xff pattern:$0x75316420]
        %v299 = vld.sshfl [vmem:[#allocation1 + $0x8] sm:$0xff pattern:$0x75316420]
        %vm300 = vcmask 31744
        %v302 = vsel %vm300, %v280, 0
        %v305 = vsel %vm300, %v281, 0
        %v308 = vsel %vm300, %v282, 0
        %v311 = vsel %vm300, %v283, 0
        %v314 = vsel %vm300, %v284, 0
        %v317 = vsel %vm300, %v285, 0
        %v320 = vsel %vm300, %v286, 0
        %v323 = vsel %vm300, %v287, 0
        %v326 = vsel %vm300, %v288, 0
        %v329 = vsel %vm300, %v289, 0
        %v332 = vsel %vm300, %v290, 0
        %v335 = vsel %vm300, %v291, 0
        %v338 = vsel %vm300, %v292, 0
        %v341 = vsel %vm300, %v293, 0
        %v344 = vsel %vm300, %v294, 0
        %v347 = vsel %vm300, %v295, 0
        %vm349 = vcmask 1043456
        %v350 = vsel %vm349, %v298, 0
        %v352 = vsel %vm349, %v299, 0
        %354 = vmatpush.msra.mxu0 0.0
        %355 = vmatpush.msra.mxu0 0.0
        %356 = vmatpush.msra.mxu0 0.0
        %357 = vmatpush.msra.mxu0 0.0
        %358 = vmatpush.msra.mxu0 0.0
        %359 = vmatpush.msra.mxu0 0.0
        %360 = vmatpush.msra.mxu0 0.0
        %361 = vmatpush.msra.mxu0 0.0
        %362 = vmatpush.msra.mxu0 0.0
        %363 = vmatpush.msra.mxu0 0.0
        %364 = vmatpush.msra.mxu0 0.0
        %365 = vmatpush.msra.mxu0 0.0
        %366 = vmatpush.msra.mxu0 0.0
        %367 = vmatpush.msra.mxu0 0.0
        %368 = vmatpush.msra.mxu0 0.0
        %369 = vmatpush.msra.mxu0 %v350
        %370 = vmatmul.f32.gmra.mxu0 %v302
        %v371 = vpop.f32.mrf.mxu0
        %v372 = vadd.f32 0.0, %v371
        %373 = vmatmul.f32.gmra.mxu0 %v305
        %v374 = vpop.f32.mrf.mxu0
        %v375 = vadd.f32 0.0, %v374
        %376 = vmatmul.f32.gmra.mxu0 %v308
        %v377 = vpop.f32.mrf.mxu0
        %v378 = vadd.f32 0.0, %v377
        %379 = vmatmul.f32.gmra.mxu0 %v311
        %v380 = vpop.f32.mrf.mxu0
        %v381 = vadd.f32 0.0, %v380
        %382 = vmatmul.f32.gmra.mxu0 %v314
        %v383 = vpop.f32.mrf.mxu0
        %v384 = vadd.f32 0.0, %v383
        %385 = vmatmul.f32.gmra.mxu0 %v317
        %v386 = vpop.f32.mrf.mxu0
        %v387 = vadd.f32 0.0, %v386
        %388 = vmatmul.f32.gmra.mxu0 %v320
        %v389 = vpop.f32.mrf.mxu0
        %v390 = vadd.f32 0.0, %v389
        %391 = vmatmul.f32.gmra.mxu0 %v323
        %v392 = vpop.f32.mrf.mxu0
        %v393 = vadd.f32 0.0, %v392
        %394 = vmatmul.f32.gmra.mxu0 %v326
        %v395 = vpop.f32.mrf.mxu0
        %v396 = vadd.f32 0.0, %v395
        %397 = vmatmul.f32.gmra.mxu0 %v329
        %v398 = vpop.f32.mrf.mxu0
        %v399 = vadd.f32 0.0, %v398
        %400 = vmatmul.f32.gmra.mxu0 %v332
        %v401 = vpop.f32.mrf.mxu0
        %v402 = vadd.f32 0.0, %v401
        %403 = vmatmul.f32.gmra.mxu0 %v335
        %v404 = vpop.f32.mrf.mxu0
        %v405 = vadd.f32 0.0, %v404
        %406 = vmatmul.f32.gmra.mxu0 %v338
        %v407 = vpop.f32.mrf.mxu0
        %v408 = vadd.f32 0.0, %v407
        %409 = vmatmul.f32.gmra.mxu0 %v341
        %v410 = vpop.f32.mrf.mxu0
        %v411 = vadd.f32 0.0, %v410
        %412 = vmatmul.f32.gmra.mxu0 %v344
        %v413 = vpop.f32.mrf.mxu0
        %v414 = vadd.f32 0.0, %v413
        %415 = vmatmul.f32.gmra.mxu0 %v347
        %v416 = vpop.f32.mrf.mxu0
        %v417 = vadd.f32 0.0, %v416
        %418 = vdwg.mxu0
        %419 = vmatpush.msra.mxu0 0.0
        %420 = vmatpush.msra.mxu0 0.0
        %421 = vmatpush.msra.mxu0 0.0
        %422 = vmatpush.msra.mxu0 0.0
        %423 = vmatpush.msra.mxu0 0.0
        %424 = vmatpush.msra.mxu0 0.0
        %425 = vmatpush.msra.mxu0 0.0
        %426 = vmatpush.msra.mxu0 0.0
        %427 = vmatpush.msra.mxu0 0.0
        %428 = vmatpush.msra.mxu0 0.0
        %429 = vmatpush.msra.mxu0 0.0
        %430 = vmatpush.msra.mxu0 0.0
        %431 = vmatpush.msra.mxu0 0.0
        %432 = vmatpush.msra.mxu0 0.0
        %433 = vmatpush.msra.mxu0 0.0
        %434 = vmatpush.msra.mxu0 %v352
        %435 = vmatmul.f32.gmra.mxu0 %v302
        %v436 = vpop.f32.mrf.mxu0
        %v437 = vadd.f32 0.0, %v436
        %438 = vmatmul.f32.gmra.mxu0 %v305
        %v439 = vpop.f32.mrf.mxu0
        %v440 = vadd.f32 0.0, %v439
        %441 = vmatmul.f32.gmra.mxu0 %v308
        %v442 = vpop.f32.mrf.mxu0
        %v443 = vadd.f32 0.0, %v442
        %444 = vmatmul.f32.gmra.mxu0 %v311
        %v445 = vpop.f32.mrf.mxu0
        %v446 = vadd.f32 0.0, %v445
        %447 = vmatmul.f32.gmra.mxu0 %v314
        %v448 = vpop.f32.mrf.mxu0
        %v449 = vadd.f32 0.0, %v448
        %450 = vmatmul.f32.gmra.mxu0 %v317
        %v451 = vpop.f32.mrf.mxu0
        %v452 = vadd.f32 0.0, %v451
        %453 = vmatmul.f32.gmra.mxu0 %v320
        %v454 = vpop.f32.mrf.mxu0
        %v455 = vadd.f32 0.0, %v454
        %456 = vmatmul.f32.gmra.mxu0 %v323
        %v457 = vpop.f32.mrf.mxu0
        %v458 = vadd.f32 0.0, %v457
        %459 = vmatmul.f32.gmra.mxu0 %v326
        %v460 = vpop.f32.mrf.mxu0
        %v461 = vadd.f32 0.0, %v460
        %462 = vmatmul.f32.gmra.mxu0 %v329
        %v463 = vpop.f32.mrf.mxu0
        %v464 = vadd.f32 0.0, %v463
        %465 = vmatmul.f32.gmra.mxu0 %v332
        %v466 = vpop.f32.mrf.mxu0
        %v467 = vadd.f32 0.0, %v466
        %468 = vmatmul.f32.gmra.mxu0 %v335
        %v469 = vpop.f32.mrf.mxu0
        %v470 = vadd.f32 0.0, %v469
        %471 = vmatmul.f32.gmra.mxu0 %v338
        %v472 = vpop.f32.mrf.mxu0
        %v473 = vadd.f32 0.0, %v472
        %474 = vmatmul.f32.gmra.mxu0 %v341
        %v475 = vpop.f32.mrf.mxu0
        %v476 = vadd.f32 0.0, %v475
        %477 = vmatmul.f32.gmra.mxu0 %v344
        %v478 = vpop.f32.mrf.mxu0
        %v479 = vadd.f32 0.0, %v478
        %480 = vmatmul.f32.gmra.mxu0 %v347
        %v481 = vpop.f32.mrf.mxu0
        %v482 = vadd.f32 0.0, %v481
        %483 = vdwg.mxu0
        %v484 = vmin.f32 %v372, %v437
        %485 = vmin.xlane.f32.xlu0 %v484
        %v486 = vpop.xlane.xlu0 %485
        %v487 = vmin.f32 %v375, %v440
        %488 = vmin.xlane.f32.xlu0 %v487
        %v489 = vpop.xlane.xlu0 %488
        %v490 = vmin.f32 %v378, %v443
        %491 = vmin.xlane.f32.xlu0 %v490
        %v492 = vpop.xlane.xlu0 %491
        %v493 = vmin.f32 %v381, %v446
        %494 = vmin.xlane.f32.xlu0 %v493
        %v495 = vpop.xlane.xlu0 %494
        %v496 = vmin.f32 %v384, %v449
        %497 = vmin.xlane.f32.xlu0 %v496
        %v498 = vpop.xlane.xlu0 %497
        %v499 = vmin.f32 %v387, %v452
        %500 = vmin.xlane.f32.xlu0 %v499
        %v501 = vpop.xlane.xlu0 %500
        %v502 = vmin.f32 %v390, %v455
        %503 = vmin.xlane.f32.xlu0 %v502
        %v504 = vpop.xlane.xlu0 %503
        %v505 = vmin.f32 %v393, %v458
        %506 = vmin.xlane.f32.xlu0 %v505
        %v507 = vpop.xlane.xlu0 %506
        %v508 = vmin.f32 %v396, %v461
        %509 = vmin.xlane.f32.xlu0 %v508
        %v510 = vpop.xlane.xlu0 %509
        %v511 = vmin.f32 %v399, %v464
        %512 = vmin.xlane.f32.xlu0 %v511
        %v513 = vpop.xlane.xlu0 %512
        %v514 = vmin.f32 %v402, %v467
        %515 = vmin.xlane.f32.xlu0 %v514
        %v516 = vpop.xlane.xlu0 %515
        %v517 = vmin.f32 %v405, %v470
        %518 = vmin.xlane.f32.xlu0 %v517
        %v519 = vpop.xlane.xlu0 %518
        %v520 = vmin.f32 %v408, %v473
        %521 = vmin.xlane.f32.xlu0 %v520
        %v522 = vpop.xlane.xlu0 %521
        %v523 = vmin.f32 %v411, %v476
        %524 = vmin.xlane.f32.xlu0 %v523
        %v525 = vpop.xlane.xlu0 %524
        %v526 = vmin.f32 %v414, %v479
        %527 = vmin.xlane.f32.xlu0 %v526
        %v528 = vpop.xlane.xlu0 %527
        %v529 = vmin.f32 %v417, %v482
        %530 = vmin.xlane.f32.xlu0 %v529
        %v531 = vpop.xlane.xlu0 %530
        %v532 = vsub.f32 %v486, %v372
        %v533 = vsub.f32 %v486, %v437
        %v534 = vsub.f32 %v489, %v375
        %v535 = vsub.f32 %v489, %v440
        %v536 = vsub.f32 %v492, %v378
        %v537 = vsub.f32 %v492, %v443
        %v538 = vsub.f32 %v495, %v381
        %v539 = vsub.f32 %v495, %v446
        %v540 = vsub.f32 %v498, %v384
        %v541 = vsub.f32 %v498, %v449
        %v542 = vsub.f32 %v501, %v387
        %v543 = vsub.f32 %v501, %v452
        %v544 = vsub.f32 %v504, %v390
        %v545 = vsub.f32 %v504, %v455
        %v546 = vsub.f32 %v507, %v393
        %v547 = vsub.f32 %v507, %v458
        %v548 = vsub.f32 %v510, %v396
        %v549 = vsub.f32 %v510, %v461
        %v550 = vsub.f32 %v513, %v399
        %v551 = vsub.f32 %v513, %v464
        %v552 = vsub.f32 %v516, %v402
        %v553 = vsub.f32 %v516, %v467
        %v554 = vsub.f32 %v519, %v405
        %v555 = vsub.f32 %v519, %v470
        %v556 = vsub.f32 %v522, %v408
        %v557 = vsub.f32 %v522, %v473
        %v558 = vsub.f32 %v525, %v411
        %v559 = vsub.f32 %v525, %v476
        %v560 = vsub.f32 %v528, %v414
        %v561 = vsub.f32 %v528, %v479
        %v562 = vsub.f32 %v531, %v417
        %v563 = vsub.f32 %v531, %v482
        %v564 = vmul.f32 %v532, 1.442695
        %v565 = vpow.pop %v564
        %v566 = vmul.f32 %v533, 1.442695
        %v567 = vpow.pop %v566
        %v568 = vmul.f32 %v534, 1.442695
        %v569 = vpow.pop %v568
        %v570 = vmul.f32 %v535, 1.442695
        %v571 = vpow.pop %v570
        %v572 = vmul.f32 %v536, 1.442695
        %v573 = vpow.pop %v572
        %v574 = vmul.f32 %v537, 1.442695
        %v575 = vpow.pop %v574
        %v576 = vmul.f32 %v538, 1.442695
        %v577 = vpow.pop %v576
        %v578 = vmul.f32 %v539, 1.442695
        %v579 = vpow.pop %v578
        %v580 = vmul.f32 %v540, 1.442695
        %v581 = vpow.pop %v580
        %v582 = vmul.f32 %v541, 1.442695
        %v583 = vpow.pop %v582
        %v584 = vmul.f32 %v542, 1.442695
        %v585 = vpow.pop %v584
        %v586 = vmul.f32 %v543, 1.442695
        %v587 = vpow.pop %v586
        %v588 = vmul.f32 %v544, 1.442695
        %v589 = vpow.pop %v588
        %v590 = vmul.f32 %v545, 1.442695
        %v591 = vpow.pop %v590
        %v592 = vmul.f32 %v546, 1.442695
        %v593 = vpow.pop %v592
        %v594 = vmul.f32 %v547, 1.442695
        %v595 = vpow.pop %v594
        %v596 = vmul.f32 %v548, 1.442695
        %v597 = vpow.pop %v596
        %v598 = vmul.f32 %v549, 1.442695
        %v599 = vpow.pop %v598
        %v600 = vmul.f32 %v550, 1.442695
        %v601 = vpow.pop %v600
        %v602 = vmul.f32 %v551, 1.442695
        %v603 = vpow.pop %v602
        %v604 = vmul.f32 %v552, 1.442695
        %v605 = vpow.pop %v604
        %v606 = vmul.f32 %v553, 1.442695
        %v607 = vpow.pop %v606
        %v608 = vmul.f32 %v554, 1.442695
        %v609 = vpow.pop %v608
        %v610 = vmul.f32 %v555, 1.442695
        %v611 = vpow.pop %v610
        %v612 = vmul.f32 %v556, 1.442695
        %v613 = vpow.pop %v612
        %v614 = vmul.f32 %v557, 1.442695
        %v615 = vpow.pop %v614
        %v616 = vmul.f32 %v558, 1.442695
        %v617 = vpow.pop %v616
        %v618 = vmul.f32 %v559, 1.442695
        %v619 = vpow.pop %v618
        %v620 = vmul.f32 %v560, 1.442695
        %v621 = vpow.pop %v620
        %v622 = vmul.f32 %v561, 1.442695
        %v623 = vpow.pop %v622
        %v624 = vmul.f32 %v562, 1.442695
        %v625 = vpow.pop %v624
        %v626 = vmul.f32 %v563, 1.442695
        %v627 = vpow.pop %v626
        %v628 = vadd.f32 %v565, %v567
        %629 = vadd.xlane.f32.xlu0 %v628
        %v630 = vpop.xlane.xlu0 %629
        %v631 = vadd.f32 %v569, %v571
        %632 = vadd.xlane.f32.xlu0 %v631
        %v633 = vpop.xlane.xlu0 %632
        %v634 = vadd.f32 %v573, %v575
        %635 = vadd.xlane.f32.xlu0 %v634
        %v636 = vpop.xlane.xlu0 %635
        %v637 = vadd.f32 %v577, %v579
        %638 = vadd.xlane.f32.xlu0 %v637
        %v639 = vpop.xlane.xlu0 %638
        %v640 = vadd.f32 %v581, %v583
        %641 = vadd.xlane.f32.xlu0 %v640
        %v642 = vpop.xlane.xlu0 %641
        %v643 = vadd.f32 %v585, %v587
        %644 = vadd.xlane.f32.xlu0 %v643
        %v645 = vpop.xlane.xlu0 %644
        %v646 = vadd.f32 %v589, %v591
        %647 = vadd.xlane.f32.xlu0 %v646
        %v648 = vpop.xlane.xlu0 %647
        %v649 = vadd.f32 %v593, %v595
        %650 = vadd.xlane.f32.xlu0 %v649
        %v651 = vpop.xlane.xlu0 %650
        %v652 = vadd.f32 %v597, %v599
        %653 = vadd.xlane.f32.xlu0 %v652
        %v654 = vpop.xlane.xlu0 %653
        %v655 = vadd.f32 %v601, %v603
        %656 = vadd.xlane.f32.xlu0 %v655
        %v657 = vpop.xlane.xlu0 %656
        %v658 = vadd.f32 %v605, %v607
        %659 = vadd.xlane.f32.xlu0 %v658
        %v660 = vpop.xlane.xlu0 %659
        %v661 = vadd.f32 %v609, %v611
        %662 = vadd.xlane.f32.xlu0 %v661
        %v663 = vpop.xlane.xlu0 %662
        %v664 = vadd.f32 %v613, %v615
        %665 = vadd.xlane.f32.xlu0 %v664
        %v666 = vpop.xlane.xlu0 %665
        %v667 = vadd.f32 %v617, %v619
        %668 = vadd.xlane.f32.xlu0 %v667
        %v669 = vpop.xlane.xlu0 %668
        %v670 = vadd.f32 %v621, %v623
        %671 = vadd.xlane.f32.xlu0 %v670
        %v672 = vpop.xlane.xlu0 %671
        %v673 = vadd.f32 %v625, %v627
        %674 = vadd.xlane.f32.xlu0 %v673
        %v675 = vpop.xlane.xlu0 %674
        %v676 = vrcp.pop %v630
        %v677 = vrcp.pop %v633
        %v678 = vrcp.pop %v636
        %v679 = vrcp.pop %v639
        %v680 = vrcp.pop %v642
        %v681 = vrcp.pop %v645
        %v682 = vrcp.pop %v648
        %v683 = vrcp.pop %v651
        %v684 = vrcp.pop %v654
        %v685 = vrcp.pop %v657
        %v686 = vrcp.pop %v660
        %v687 = vrcp.pop %v663
        %v688 = vrcp.pop %v666
        %v689 = vrcp.pop %v669
        %v690 = vrcp.pop %v672
        %v691 = vrcp.pop %v675
        %v692 = vmul.f32 %v565, %v676
        %v693 = vmul.f32 %v567, %v676
        %v694 = vmul.f32 %v569, %v677
        %v695 = vmul.f32 %v571, %v677
        %v696 = vmul.f32 %v573, %v678
        %v697 = vmul.f32 %v575, %v678
        %v698 = vmul.f32 %v577, %v679
        %v699 = vmul.f32 %v579, %v679
        %v700 = vmul.f32 %v581, %v680
        %v701 = vmul.f32 %v583, %v680
        %v702 = vmul.f32 %v585, %v681
        %v703 = vmul.f32 %v587, %v681
        %v704 = vmul.f32 %v589, %v682
        %v705 = vmul.f32 %v591, %v682
        %v706 = vmul.f32 %v593, %v683
        %v707 = vmul.f32 %v595, %v683
        %v708 = vmul.f32 %v597, %v684
        %v709 = vmul.f32 %v599, %v684
        %v710 = vmul.f32 %v601, %v685
        %v711 = vmul.f32 %v603, %v685
        %v712 = vmul.f32 %v605, %v686
        %v713 = vmul.f32 %v607, %v686
        %v714 = vmul.f32 %v609, %v687
        %v715 = vmul.f32 %v611, %v687
        %v716 = vmul.f32 %v613, %v688
        %v717 = vmul.f32 %v615, %v688
        %v718 = vmul.f32 %v617, %v689
        %v719 = vmul.f32 %v619, %v689
        %v720 = vmul.f32 %v621, %v690
        %v721 = vmul.f32 %v623, %v690
        %v722 = vmul.f32 %v625, %v691
        %v723 = vmul.f32 %v627, %v691
        %724 = vst [vmem:[#allocation1] ss:$2 sm:$0xff] %v260
        %v725 = vld.sshfl [vmem:[#allocation1] sm:$0xff pattern:$0x75316420]
        %v726 = vld.sshfl [vmem:[#allocation1 + $0x8] sm:$0xff pattern:$0x75316420]
        %729 = vmatpush.xpose.msra.mxu0 %v722
        %730 = vmatpush.xpose.msra.mxu0 %v720
        %731 = vmatpush.xpose.msra.mxu0 %v718
        %732 = vmatpush.xpose.msra.mxu0 %v716
        %733 = vmatpush.xpose.msra.mxu0 %v714
        %734 = vmatpush.xpose.msra.mxu0 %v712
        %735 = vmatpush.xpose.msra.mxu0 %v710
        %736 = vmatpush.xpose.msra.mxu0 %v708
        %737 = vmatpush.xpose.msra.mxu0 %v706
        %738 = vmatpush.xpose.msra.mxu0 %v704
        %739 = vmatpush.xpose.msra.mxu0 %v702
        %740 = vmatpush.xpose.msra.mxu0 %v700
        %741 = vmatpush.xpose.msra.mxu0 %v698
        %742 = vmatpush.xpose.msra.mxu0 %v696
        %743 = vmatpush.xpose.msra.mxu0 %v694
        %744 = vmatpush.xpose.msra.mxu0 %v692
        %745 = vmatmul.f32.gmra.mxu0 %v725
        %v746 = vpop.f32.mrf.mxu0
        %v747 = vadd.f32 0.0, %v746
        %748 = vdwg.mxu0
        %749 = vmatpush.xpose.msra.mxu0 %v723
        %750 = vmatpush.xpose.msra.mxu0 %v721
        %751 = vmatpush.xpose.msra.mxu0 %v719
        %752 = vmatpush.xpose.msra.mxu0 %v717
        %753 = vmatpush.xpose.msra.mxu0 %v715
        %754 = vmatpush.xpose.msra.mxu0 %v713
        %755 = vmatpush.xpose.msra.mxu0 %v711
        %756 = vmatpush.xpose.msra.mxu0 %v709
        %757 = vmatpush.xpose.msra.mxu0 %v707
        %758 = vmatpush.xpose.msra.mxu0 %v705
        %759 = vmatpush.xpose.msra.mxu0 %v703
        %760 = vmatpush.xpose.msra.mxu0 %v701
        %761 = vmatpush.xpose.msra.mxu0 %v699
        %762 = vmatpush.xpose.msra.mxu0 %v697
        %763 = vmatpush.xpose.msra.mxu0 %v695
        %764 = vmatpush.xpose.msra.mxu0 %v693
        %765 = vmatmul.f32.gmra.mxu0 %v726
        %v766 = vpop.f32.mrf.mxu0
        %v767 = vadd.f32 %v747, %v766
        %768 = vdwg.mxu0
        %769 = vst [vmem:[#allocation1] ss:$2 sm:$0xff] %v260
        %v770 = vld.sshfl [vmem:[#allocation1] sm:$0xff pattern:$0x75316420]
        %v771 = vld.sshfl [vmem:[#allocation1 + $0x8] sm:$0xff pattern:$0x75316420]
        %774 = vst [vmem:[#allocation1] ss:$2 sm:$0xff] %v260
        %v775 = vld.sshfl [vmem:[#allocation1] sm:$0xff pattern:$0x75316420]
        %v776 = vld.sshfl [vmem:[#allocation1 + $0x8] sm:$0xff pattern:$0x75316420]
        %779 = vmatpush.xpose.msra.mxu0 0.0
        %780 = vmatpush.xpose.msra.mxu0 0.0
        %781 = vmatpush.xpose.msra.mxu0 0.0
        %782 = vmatpush.xpose.msra.mxu0 0.0
        %783 = vmatpush.xpose.msra.mxu0 0.0
        %784 = vmatpush.xpose.msra.mxu0 0.0
        %785 = vmatpush.xpose.msra.mxu0 0.0
        %786 = vmatpush.xpose.msra.mxu0 0.0
        %787 = vmatpush.xpose.msra.mxu0 0.0
        %788 = vmatpush.xpose.msra.mxu0 0.0
        %789 = vmatpush.xpose.msra.mxu0 0.0
        %790 = vmatpush.xpose.msra.mxu0 0.0
        %791 = vmatpush.xpose.msra.mxu0 0.0
        %792 = vmatpush.xpose.msra.mxu0 0.0
        %793 = vmatpush.xpose.msra.mxu0 0.0
        %794 = vmatpush.xpose.msra.mxu0 %v775
        %795 = vmatmul.f32.gmra.mxu0 %v770
        %v796 = vpop.f32.mrf.mxu0
        %v797 = vadd.f32 0.0, %v796
        %798 = vdwg.mxu0
        %799 = vmatpush.xpose.msra.mxu0 0.0
        %800 = vmatpush.xpose.msra.mxu0 0.0
        %801 = vmatpush.xpose.msra.mxu0 0.0
        %802 = vmatpush.xpose.msra.mxu0 0.0
        %803 = vmatpush.xpose.msra.mxu0 0.0
        %804 = vmatpush.xpose.msra.mxu0 0.0
        %805 = vmatpush.xpose.msra.mxu0 0.0
        %806 = vmatpush.xpose.msra.mxu0 0.0
        %807 = vmatpush.xpose.msra.mxu0 0.0
        %808 = vmatpush.xpose.msra.mxu0 0.0
        %809 = vmatpush.xpose.msra.mxu0 0.0
        %810 = vmatpush.xpose.msra.mxu0 0.0
        %811 = vmatpush.xpose.msra.mxu0 0.0
        %812 = vmatpush.xpose.msra.mxu0 0.0
        %813 = vmatpush.xpose.msra.mxu0 0.0
        %814 = vmatpush.xpose.msra.mxu0 %v776
        %815 = vmatmul.f32.gmra.mxu0 %v771
        %v816 = vpop.f32.mrf.mxu0
        %v817 = vadd.f32 %v797, %v816
        %818 = vdwg.mxu0
        %vm819 = vcmask 27648
        %v820 = vsel %vm819, %v817, inf
        %821 = vmin.xlane.f32.xlu0 %v820
        %v822 = vpop.xlane.xlu0 %821
        %v823 = vsub.f32 %v822, %v817
        %v824 = vmul.f32 %v823, 1.442695
        %v825 = vpow.pop %v824
        %v826 = vsel %vm819, %v825, 0.0
        %827 = vadd.xlane.f32.xlu0 %v826
        %v828 = vpop.xlane.xlu0 %827
        %v829 = vrcp.pop %v828
        %v830 = vmul.f32 %v825, %v829
        %v832 = vsel %vm300, %v830, 0
        %v835 = vsel %vm349, %v261, 0
        %837 = vmatpush.msra.mxu0 0.0
        %838 = vmatpush.msra.mxu0 0.0
        %839 = vmatpush.msra.mxu0 0.0
        %840 = vmatpush.msra.mxu0 0.0
        %841 = vmatpush.msra.mxu0 0.0
        %842 = vmatpush.msra.mxu0 0.0
        %843 = vmatpush.msra.mxu0 0.0
        %844 = vmatpush.msra.mxu0 0.0
        %845 = vmatpush.msra.mxu0 0.0
        %846 = vmatpush.msra.mxu0 0.0
        %847 = vmatpush.msra.mxu0 0.0
        %848 = vmatpush.msra.mxu0 0.0
        %849 = vmatpush.msra.mxu0 0.0
        %850 = vmatpush.msra.mxu0 0.0
        %851 = vmatpush.msra.mxu0 0.0
        %852 = vmatpush.msra.mxu0 %v835
        %853 = vmatmul.f32.gmra.mxu0 %v832
        %v854 = vpop.f32.mrf.mxu0
        %v855 = vadd.f32 0.0, %v854
        %856 = vdwg.mxu0
        %v857 = vstv %s262
        %v858 = vmul.f32 %v857, %v767
        %v859 = vstv %s263
        %v860 = vmul.f32 %v859, %v855
        %v861 = vadd.f32 %v858, %v860
        %v862 = vmul.f32 %v261, 2.0
        %v863 = vadd.f32 %v861, %v862
        %864 = vst [vmem:[%s259] sm:$0xf] %v863
        %s865 = sand.u32 %s121, 1
        %s866 = scalar_lea.sflag [#allocation4], %s865
        %s867 = sand.u32 %s121, 1
        %s868 = smul.addr %s867, 4
        %s869 = scalar_lea.vmem [#allocation9], %s868
        // Predicated region
        $region45: #{tpu_custom_call.1} parent=31 // pred_check
          %p870 = pneg %p131
        $region46: #{tpu_custom_call.1} parent=31 // pred_check_branch
          %872 = sbr.rel (%p870) target = $region48
        $region47: #{tpu_custom_call.1} parent=31 // pred_region
          %874 = vsyncadd %s866, 0
          %s875 = smul.addr %s28, 2
          %s876 = sadd.s32 %s29, %s875
          %s877 = smul.addr %s876, 4
          %s878 = scalar_lea.hbm %s3, %s877
          %s880 = sshll.u32 %s869, 4
          %s881 = int_to_ptr.vmem [resolvable:$true] %s880
          %s882 = sshll.u32 %s878, 4
          %s883 = int_to_ptr.hbm [resolvable:$true] %s882
          %885 = dma.vmem_to_hbm [thread:$0]  %s881, 64, %s883, %s866
        $region48: #{tpu_custom_call.1} parent=31 // pred_fallthru
          _
      $region32: #{tpu_custom_call.1} parent=5 // pred_fallthru
        _
      %p886 = scmp.le.s32.totalorder 2, %s19
      // Predicated region
      $region49: #{tpu_custom_call.1} parent=5 // pred_check
        %p887 = pneg %p886
      $region50: #{tpu_custom_call.1} parent=5 // pred_check_branch
        %889 = sbr.rel (%p887) target = $region52
      $region51: #{tpu_custom_call.1} parent=5 // pred_region
        %s890 = ssub.s32 %s19, 2
        // Predicated region
        $region53: #{tpu_custom_call.1} parent=51 // pred_check
          %p891 = pneg %p137
        $region54: #{tpu_custom_call.1} parent=51 // pred_check_branch
          %893 = sbr.rel (%p891) target = $region56
        $region55: #{tpu_custom_call.1} parent=51 // pred_region
          %s894 = sand.u32 %s122, 1
          %s895 = scalar_lea.sflag [#allocation4], %s894
          %s896 = sand.u32 %s122, 1
          %s897 = smul.addr %s896, 4
          %s898 = scalar_lea.vmem [#allocation9], %s897
          %900 = dma.done %s895, 64
        $region56: #{tpu_custom_call.1} parent=51 // pred_fallthru
          _
      $region52: #{tpu_custom_call.1} parent=5 // pred_fallthru
        _
    $region6: #{tpu_custom_call.1} parent=1 // loop_footer
      %s23 = sadd.s32 1, %s19
    $region7: #{tpu_custom_call.1} parent=1 // loop_footer_branch
      %18 = sbr.rel target = $region3
    $region8: #{tpu_custom_call.1} parent=1 // loop_exit
      _
    %901 = vsyncpa [#allocation3], 1
    %s902 = scalar_lea.sflag [#allocation3], 1
    %903 = vsyncpa %s902, 1
    %904 = vsyncpa [#allocation7], 1
    %s905 = scalar_lea.sflag [#allocation7], 1
    %906 = vsyncpa %s905, 1
    %907 = vsyncpa [#allocation4], 1
    %s908 = scalar_lea.sflag [#allocation4], 1
    %909 = vsyncpa %s908, 1
    %910 = vsyncpa [#allocation5], 1
    %s911 = scalar_lea.sflag [#allocation5], 1
    %912 = vsyncpa %s911, 1

</llo_original>
